<compile_context>
chip_gen: v5e
topology: v5e:2x2
jax: 0.10.0
libtpu: 0.0.40
codegen_flags: <defaults>
</compile_context>

<pallas_src>
import functools

import jax
import jax.numpy as jnp
from jax.experimental import pallas as pl
from jax.experimental.pallas import tpu as pltpu


def actor_kernel(xT_ref, w1t_ref, b1_ref, w2t_ref, b2_ref, bound_ref, out_ref):
    """One batch tile of the actor forward pass, batch along lanes.

    xT_ref   : (S, TB)   states^T            (VMEM, tiled over batch)
    w1t_ref  : (Hp, S)   layer-1 weight^T    (VMEM, resident, zero-padded rows)
    b1_ref   : (Hp, 1)   layer-1 bias column (VMEM, resident, zero-padded)
    w2t_ref  : (A, Hp)   layer-2 weight^T    (VMEM, resident, zero-padded cols)
    b2_ref   : (1, A)    layer-2 bias        (SMEM)
    bound_ref: (1, A)    action bound        (SMEM)
    out_ref  : (A, TB)   scaled actions^T    (lane-dense output)
    """
    A = out_ref.shape[0]

    # Layer 1 on the MXU: (Hp, S) @ (S, TB) -> (Hp, TB), f32 accumulation.
    h = jnp.dot(w1t_ref[...], xT_ref[...], preferred_element_type=jnp.float32)
    h = jnp.maximum(h + b1_ref[...], 0.0)                 # bias + ReLU (VPU)

    # Layer 2 on the MXU: (A, Hp) @ (Hp, TB) -> (A, TB).
    a = jnp.dot(w2t_ref[...], h, preferred_element_type=jnp.float32)

    # Bias, tanh (EUP) and action-bound scaling; A is tiny (1 for Pendulum).
    for i in range(A):
        out_ref[i:i + 1, :] = (
            jnp.tanh(a[i:i + 1, :] + b2_ref[0, i]) * bound_ref[0, i]
        )


def _pick_block_b(batch, max_block=4096):
    """Largest lane-aligned batch tile, keeping >= 2 grid steps when possible
    (so both v7x TensorCores get work). 4096 cap keeps the (32, block_b) f32
    hidden tile + double-buffered I/O far under every chip's VMEM budget."""
    half = pl.cdiv(batch, 2)
    blk = pl.cdiv(half, 128) * 128
    return max(128, min(max_block, blk))


def _actor_forward_xT(xT, w1, b1, w2, b2, action_bound, block_b):
    """Core path. xT is (S, B) feature-major states; returns (A, B) actions."""
    S, B = xT.shape
    H, A = w2.shape
    Hp = pl.cdiv(H, 8) * 8                      # 30 -> 32: clean sublane groups

    grid_b = pl.cdiv(B, block_b)                # ragged last block is fine:
                                                # per-column math, masked writes

    # Zero-padded, feature-major parameter layouts (padding contributes 0).
    w1t = jnp.zeros((Hp, S), jnp.float32).at[:H, :].set(
        jnp.asarray(w1, jnp.float32).T)
    b1c = jnp.zeros((Hp, 1), jnp.float32).at[:H, :].set(
        jnp.asarray(b1, jnp.float32).reshape(H, 1))
    w2t = jnp.zeros((A, Hp), jnp.float32).at[:, :H].set(
        jnp.asarray(w2, jnp.float32).T)
    b2r = jnp.asarray(b2, jnp.float32).reshape(1, A)
    bound = jnp.broadcast_to(
        jnp.asarray(action_bound, jnp.float32).reshape(-1), (A,)).reshape(1, A)

    smem = pltpu.MemorySpace.SMEM
    return pl.pallas_call(
        actor_kernel,
        out_shape=jax.ShapeDtypeStruct((A, B), jnp.float32),
        grid=(grid_b,),
        in_specs=[
            pl.BlockSpec((S, block_b), lambda i: (0, i)),               # states
            pl.BlockSpec((Hp, S), lambda i: (0, 0)),                    # W1^T
            pl.BlockSpec((Hp, 1), lambda i: (0, 0)),                    # b1
            pl.BlockSpec((A, Hp), lambda i: (0, 0)),                    # W2^T
            pl.BlockSpec((1, A), lambda i: (0, 0), memory_space=smem),  # b2
            pl.BlockSpec((1, A), lambda i: (0, 0), memory_space=smem),  # bound
        ],
        out_specs=pl.BlockSpec((A, block_b), lambda i: (0, i)),         # lane-dense
        compiler_params=pltpu.CompilerParams(
            dimension_semantics=("parallel",),
        ),
    )(xT, w1t, b1c, w2t, b2r, bound)


@functools.partial(jax.jit, static_argnames=("block_b",))
def actor_forward(states, w1, b1, w2, b2, action_bound, *, block_b=None):
    """states: (B, state_dim) f32 -> (B, action_dim) f32 (PyTorch layout)."""
    B, _ = states.shape
    if block_b is None:
        block_b = _pick_block_b(B)
    # NOTE: this transpose is one extra HBM pass over the (small) state rows;
    # producers that can supply feature-major states should use
    # actor_forward_feature_major() below to avoid it.
    xT = jnp.asarray(states, jnp.float32).T
    outT = _actor_forward_xT(xT, w1, b1, w2, b2, action_bound, block_b)
    return outT.T


@functools.partial(jax.jit, static_argnames=("block_b",))
def actor_forward_feature_major(states_t, w1, b1, w2, b2, action_bound, *,
                                block_b=None):
    """states_t: (state_dim, B) -> (action_dim, B). Fully transpose-free path."""
    _, B = states_t.shape
    if block_b is None:
        block_b = _pick_block_b(B)
    return _actor_forward_xT(jnp.asarray(states_t, jnp.float32),
                             w1, b1, w2, b2, action_bound, block_b)


def init_params(key, state_dim, action_dim, num_hiddens=30):
    # Matches the PyTorch init: weights ~ N(0, 0.001), biases = 0.
    k1, k2 = jax.random.split(key)
    w1 = 0.001 * jax.random.normal(k1, (state_dim, num_hiddens), jnp.float32)
    b1 = jnp.zeros((1, num_hiddens), jnp.float32)
    w2 = 0.001 * jax.random.normal(k2, (num_hiddens, action_dim), jnp.float32)
    b2 = jnp.zeros((1, action_dim), jnp.float32)
    return w1, b1, w2, b2


if __name__ == "__main__":
    # Pendulum-v1: state_dim=3, action_dim=1, action_bound=2.0.
    state_dim, action_dim = 3, 1
    batch = 200      # not a multiple of 128 -> exercises the ragged last block
    action_bound = jnp.full((1, action_dim), 2.0, jnp.float32)

    key = jax.random.PRNGKey(0)
    k_params, k_states = jax.random.split(key)
    w1, b1, w2, b2 = init_params(k_params, state_dim, action_dim)
    states = jax.random.normal(k_states, (batch, state_dim), jnp.float32)

    out = actor_forward(states, w1, b1, w2, b2, action_bound)
    out = jax.block_until_ready(out)

    # Sanity check against a pure-JAX reference (same math as the PyTorch net).
    with jax.default_matmul_precision("float32"):
        ref = jnp.tanh(jnp.maximum(states @ w1 + b1, 0.0) @ w2 + b2) * action_bound
    assert out.shape == (batch, action_dim)
    assert jnp.allclose(out, ref, atol=1e-6, rtol=1e-3), "mismatch vs reference"

    print("KERNEL_OK")
</pallas_src>

<mosaic_0001>
module attributes {stable_mosaic.version = 11 : i64} {
  func.func @actor_kernel(%arg0: i32, %arg1: memref<3x128xf32, #tpu.memory_space<vmem>>, %arg2: memref<32x3xf32, #tpu.memory_space<vmem>>, %arg3: memref<32x1xf32, #tpu.memory_space<vmem>>, %arg4: memref<1x32xf32, #tpu.memory_space<vmem>>, %arg5: memref<1x1xf32, #tpu.memory_space<smem>>, %arg6: memref<1x1xf32, #tpu.memory_space<smem>>, %arg7: memref<1x128xf32, #tpu.memory_space<vmem>>) attributes {dimension_semantics = [#tpu.dimension_semantics<parallel>], iteration_bounds = array<i64: 2>, scalar_prefetch = 0 : i64, scratch_operands = 0 : i64, tpu.core_type = #tpu.core_type<tc>, window_params = [{transform_indices = @transform_0, window_bounds = array<i64: 3, 128>}, {pipeline_mode = #tpu.pipeline_mode<synchronous>, transform_indices = @transform_1, window_bounds = array<i64: 32, 3>}, {pipeline_mode = #tpu.pipeline_mode<synchronous>, transform_indices = @transform_2, window_bounds = array<i64: 32, 1>}, {pipeline_mode = #tpu.pipeline_mode<synchronous>, transform_indices = @transform_3, window_bounds = array<i64: 1, 32>}, {transform_indices = @transform_4, window_bounds = array<i64: 1, 1>}, {transform_indices = @transform_5, window_bounds = array<i64: 1, 1>}, {transform_indices = @transform_6, window_bounds = array<i64: 1, 128>}]} {
    %c0 = arith.constant 0 : index
    %c0_0 = arith.constant 0 : index
    %0 = vector.load %arg2[%c0, %c0_0] : memref<32x3xf32, #tpu.memory_space<vmem>>, vector<32x3xf32>
    %c0_1 = arith.constant 0 : index
    %c0_2 = arith.constant 0 : index
    %1 = vector.load %arg1[%c0_1, %c0_2] : memref<3x128xf32, #tpu.memory_space<vmem>>, vector<3x128xf32>
    %cst = arith.constant dense<0.000000e+00> : vector<32x128xf32>
    %2 = tpu.matmul %0, %1, %cst {dimension_numbers = #tpu.dot_dimension_numbers<[1], [0], [0], [1], [0, 0, 1, 1], [], []>} : vector<32x3xf32>, vector<3x128xf32>, vector<32x128xf32> -> vector<32x128xf32>
    %c0_3 = arith.constant 0 : index
    %c0_4 = arith.constant 0 : index
    %3 = vector.load %arg3[%c0_3, %c0_4] : memref<32x1xf32, #tpu.memory_space<vmem>>, vector<32x1xf32>
    %4 = vector.broadcast %3 : vector<32x1xf32> to vector<32x128xf32>
    %5 = arith.addf %2, %4 : vector<32x128xf32>
    %cst_5 = arith.constant 0.000000e+00 : f32
    %6 = vector.broadcast %cst_5 : f32 to vector<32x128xf32>
    %7 = arith.maximumf %5, %6 : vector<32x128xf32>
    %c0_6 = arith.constant 0 : index
    %c0_7 = arith.constant 0 : index
    %8 = vector.load %arg4[%c0_6, %c0_7] : memref<1x32xf32, #tpu.memory_space<vmem>>, vector<1x32xf32>
    %cst_8 = arith.constant dense<0.000000e+00> : vector<1x128xf32>
    %9 = tpu.matmul %8, %7, %cst_8 {dimension_numbers = #tpu.dot_dimension_numbers<[1], [0], [0], [1], [0, 0, 1, 1], [], []>} : vector<1x32xf32>, vector<32x128xf32>, vector<1x128xf32> -> vector<1x128xf32>
    %c0_9 = arith.constant 0 : index
    %c0_10 = arith.constant 0 : index
    %10 = memref.load %arg5[%c0_9, %c0_10] : memref<1x1xf32, #tpu.memory_space<smem>>
    %11 = vector.broadcast %10 : f32 to vector<1x128xf32>
    %12 = arith.addf %9, %11 : vector<1x128xf32>
    %13 = math.tanh %12 : vector<1x128xf32>
    %c0_11 = arith.constant 0 : index
    %c0_12 = arith.constant 0 : index
    %14 = memref.load %arg6[%c0_11, %c0_12] : memref<1x1xf32, #tpu.memory_space<smem>>
    %15 = vector.broadcast %14 : f32 to vector<1x128xf32>
    %16 = arith.mulf %13, %15 : vector<1x128xf32>
    %c0_13 = arith.constant 0 : index
    %c0_14 = arith.constant 0 : index
    %17 = vector.load %arg7[%c0_13, %c0_14] : memref<1x128xf32, #tpu.memory_space<vmem>>, vector<1x128xf32>
    tpu.vector_store %arg7[%c0_13, %c0_14], %16 {strides = array<i32>} : memref<1x128xf32, #tpu.memory_space<vmem>>, vector<1x128xf32>,
    return
  }
  func.func @transform_0(%arg0: i32) -> (i32, i32) {
    %c0_i32 = arith.constant 0 : i32
    %c0_i32_0 = arith.constant 0 : i32
    return %c0_i32, %arg0 : i32, i32
  }
  func.func @transform_1(%arg0: i32) -> (i32, i32) {
    %c0_i32 = arith.constant 0 : i32
    %c0_i32_0 = arith.constant 0 : i32
    %c0_i32_1 = arith.constant 0 : i32
    return %c0_i32, %c0_i32_0 : i32, i32
  }
  func.func @transform_2(%arg0: i32) -> (i32, i32) {
    %c0_i32 = arith.constant 0 : i32
    %c0_i32_0 = arith.constant 0 : i32
    %c0_i32_1 = arith.constant 0 : i32
    return %c0_i32, %c0_i32_0 : i32, i32
  }
  func.func @transform_3(%arg0: i32) -> (i32, i32) {
    %c0_i32 = arith.constant 0 : i32
    %c0_i32_0 = arith.constant 0 : i32
    %c0_i32_1 = arith.constant 0 : i32
    return %c0_i32, %c0_i32_0 : i32, i32
  }
  func.func @transform_4(%arg0: i32) -> (i32, i32) {
    %c0_i32 = arith.constant 0 : i32
    %c0_i32_0 = arith.constant 0 : i32
    %c0_i32_1 = arith.constant 0 : i32
    return %c0_i32, %c0_i32_0 : i32, i32
  }
  func.func @transform_5(%arg0: i32) -> (i32, i32) {
    %c0_i32 = arith.constant 0 : i32
    %c0_i32_0 = arith.constant 0 : i32
    %c0_i32_1 = arith.constant 0 : i32
    return %c0_i32, %c0_i32_0 : i32, i32
  }
  func.func @transform_6(%arg0: i32) -> (i32, i32) {
    %c0_i32 = arith.constant 0 : i32
    %c0_i32_0 = arith.constant 0 : i32
    return %c0_i32, %arg0 : i32, i32
  }
}

</mosaic_0001>

<llo_original>
// kernel: actor_forward.1
$region0: #{actor_forward.1}
  #allocation0 [shape = 'u32[]', space=smem, size = 0x4, offset = 0x4, fixed_abs, tag = 'smem constant byte address 0x4 - core index']
  #allocation1 [shape = 'u32[72,128]{1,0:T(1,128)}', space=vmem, size = 0x9000, scoped, tag = 'internal scratch']
  #allocation2 [shape = 'f32[1,1]{1,0:T(1,128)S(6)}', space=smem, size = 0x200, scoped, tag = 'scoped memory for actor_forward.1']
  #allocation3 [shape = 'f32[1,1]{1,0:T(1,128)S(6)}', space=smem, size = 0x200, scoped, tag = 'scoped memory for actor_forward.1']
  %s0 = inlined_call_operand.vmem [shape: f32[3,200], index: 0, kind: input, shape index: {}]
  %s1 = inlined_call_operand.vmem [shape: f32[32,3], index: 1, kind: input, shape index: {}]
  %s2 = inlined_call_operand.vmem [shape: f32[32,1], index: 2, kind: input, shape index: {}]
  %s3 = inlined_call_operand.vmem [shape: f32[1,32], index: 3, kind: input, shape index: {}]
  %s4 = inlined_call_operand.<no memory space> [shape: f32[1,1], index: 4, kind: input, shape index: {}]
  %s5 = inlined_call_operand.<no memory space> [shape: f32[1,1], index: 5, kind: input, shape index: {}]
  %s6 = inlined_call_operand.hbm [shape: f32[1,200], index: 6, kind: output, shape index: {}]
  %s7 = sld [smem:[#allocation0]]
  $region57: #{actor_forward.1} parent=0
    _
  %s9 = ssub.s32 1, %s7
  %s10 = scalar_select 0, %s9, %s7
  %11 = sst [smem:[#allocation2]] %s4
  %12 = sst [smem:[#allocation3]] %s5
  $region1: #{actor_forward.1} parent=0
    #allocation4 [shape = 'u8[1024]{0}', space=vmem, size = 0x400, scoped, tag = 'output window, operand 0']
    #allocation5 [shape = 's32[2]{0}', space=sflag, size = 0x8, scoped, tag = 'scoped memory for actor_forward.1']
    %13 = vsyncpa [#allocation5], 0
    %s14 = scalar_lea.sflag [#allocation5], 1
    %15 = vsyncpa %s14, 0
    loop: start=0, step=1, limit=4
    $region2: #{actor_forward.1} parent=1 // loop_pre_header
      _
    $region3: #{actor_forward.1} parent=1 // loop_header
      %s17 = sphi 0, %s21
      %p18 = scmp.ge.s32.totalorder %s17, 4
      %s27 = sphi 0, %s29
      %s30 = sphi 0, %s27
      %s31 = sphi 0, %s30
      %s47 = sphi 0, %s31
      %s51 = sphi 0, %s51
      %s53 = sphi 0, %s51
      %s54 = sphi 0, %s53
      %s68 = sphi 0, %s54
      %s72 = sphi 0, %s72
      %s74 = sphi 0, %s72
      %s75 = sphi 0, %s74
      %s89 = sphi 0, %s75
      %s93 = sphi 0, %s93
      %s95 = sphi 0, %s93
      %s96 = sphi 0, %s95
      %s110 = sphi 0, %s96
      %s114 = sphi 0, %s114
      %s116 = sphi 0, %s114
      %s117 = sphi 0, %s116
      %s131 = sphi 0, %s117
      %s135 = sphi 0, %s135
      %s137 = sphi 0, %s135
      %s138 = sphi 0, %s137
      %s152 = sphi 0, %s138
      %s158 = sphi 0, %s160
      %s161 = sphi 0, %s158
      %s162 = sphi 0, %s161
      %s178 = sphi 0, %s162
    $region4: #{actor_forward.1} parent=1 // loop_header_branch
      %20 = sbr.rel (%p18) target = $region8
    $region5: #{actor_forward.1} parent=1 // loop_body
      %s22 = ssub.s32 %s17, 1
      %s23 = ssub.s32 %s17, 2
      %s24 = sadd.s32 %s17, 1
      %s25 = ssub.s32 %s17, %s24
      %p26 = scmp.eq.s32.totalorder %s25, 0
      %s28 = sadd.s32 %s27, 1
      %s29 = scalar_select %p26, %s27, %s28
      %p32 = pneg %p26
      %p33 = scmp.eq.s32.totalorder %s17, 1
      %p34 = por %p32, %p33
      %p35 = scmp.ne.s32.totalorder %s27, %s30
      %p36 = scmp.eq.s32.totalorder %s17, 0
      %p37 = por %p35, %p36
      %p38 = scmp.ne.s32.totalorder %s27, %s30
      %p39 = scmp.eq.s32.totalorder %s22, 1
      %p40 = por %p38, %p39
      %p41 = scmp.ne.s32.totalorder %s30, %s31
      %p42 = scmp.eq.s32.totalorder %s22, 0
      %p43 = por %p41, %p42
      %p44 = scmp.ne.s32.totalorder %s30, %s31
      %p45 = scmp.eq.s32.totalorder %s23, 1
      %p46 = por %p44, %p45
      %p48 = scmp.ne.s32.totalorder %s31, %s47
      %p49 = scmp.eq.s32.totalorder %s23, 0
      %p50 = por %p48, %p49
      %s52 = sadd.s32 %s51, 1
      %p55 = scmp.eq.s32.totalorder %s17, 1
      %p56 = scmp.ne.s32.totalorder %s51, %s53
      %p57 = scmp.eq.s32.totalorder %s17, 0
      %p58 = por %p56, %p57
      %p59 = scmp.ne.s32.totalorder %s51, %s53
      %p60 = scmp.eq.s32.totalorder %s22, 1
      %p61 = por %p59, %p60
      %p62 = scmp.ne.s32.totalorder %s53, %s54
      %p63 = scmp.eq.s32.totalorder %s22, 0
      %p64 = por %p62, %p63
      %p65 = scmp.ne.s32.totalorder %s53, %s54
      %p66 = scmp.eq.s32.totalorder %s23, 1
      %p67 = por %p65, %p66
      %p69 = scmp.ne.s32.totalorder %s54, %s68
      %p70 = scmp.eq.s32.totalorder %s23, 0
      %p71 = por %p69, %p70
      %s73 = sadd.s32 %s72, 1
      %p76 = scmp.eq.s32.totalorder %s17, 1
      %p77 = scmp.ne.s32.totalorder %s72, %s74
      %p78 = scmp.eq.s32.totalorder %s17, 0
      %p79 = por %p77, %p78
      %p80 = scmp.ne.s32.totalorder %s72, %s74
      %p81 = scmp.eq.s32.totalorder %s22, 1
      %p82 = por %p80, %p81
      %p83 = scmp.ne.s32.totalorder %s74, %s75
      %p84 = scmp.eq.s32.totalorder %s22, 0
      %p85 = por %p83, %p84
      %p86 = scmp.ne.s32.totalorder %s74, %s75
      %p87 = scmp.eq.s32.totalorder %s23, 1
      %p88 = por %p86, %p87
      %p90 = scmp.ne.s32.totalorder %s75, %s89
      %p91 = scmp.eq.s32.totalorder %s23, 0
      %p92 = por %p90, %p91
      %s94 = sadd.s32 %s93, 1
      %p97 = scmp.eq.s32.totalorder %s17, 1
      %p98 = scmp.ne.s32.totalorder %s93, %s95
      %p99 = scmp.eq.s32.totalorder %s17, 0
      %p100 = por %p98, %p99
      %p101 = scmp.ne.s32.totalorder %s93, %s95
      %p102 = scmp.eq.s32.totalorder %s22, 1
      %p103 = por %p101, %p102
      %p104 = scmp.ne.s32.totalorder %s95, %s96
      %p105 = scmp.eq.s32.totalorder %s22, 0
      %p106 = por %p104, %p105
      %p107 = scmp.ne.s32.totalorder %s95, %s96
      %p108 = scmp.eq.s32.totalorder %s23, 1
      %p109 = por %p107, %p108
      %p111 = scmp.ne.s32.totalorder %s96, %s110
      %p112 = scmp.eq.s32.totalorder %s23, 0
      %p113 = por %p111, %p112
      %s115 = sadd.s32 %s114, 1
      %p118 = scmp.eq.s32.totalorder %s17, 1
      %p119 = scmp.ne.s32.totalorder %s114, %s116
      %p120 = scmp.eq.s32.totalorder %s17, 0
      %p121 = por %p119, %p120
      %p122 = scmp.ne.s32.totalorder %s114, %s116
      %p123 = scmp.eq.s32.totalorder %s22, 1
      %p124 = por %p122, %p123
      %p125 = scmp.ne.s32.totalorder %s116, %s117
      %p126 = scmp.eq.s32.totalorder %s22, 0
      %p127 = por %p125, %p126
      %p128 = scmp.ne.s32.totalorder %s116, %s117
      %p129 = scmp.eq.s32.totalorder %s23, 1
      %p130 = por %p128, %p129
      %p132 = scmp.ne.s32.totalorder %s117, %s131
      %p133 = scmp.eq.s32.totalorder %s23, 0
      %p134 = por %p132, %p133
      %s136 = sadd.s32 %s135, 1
      %p139 = scmp.eq.s32.totalorder %s17, 1
      %p140 = scmp.ne.s32.totalorder %s135, %s137
      %p141 = scmp.eq.s32.totalorder %s17, 0
      %p142 = por %p140, %p141
      %p143 = scmp.ne.s32.totalorder %s135, %s137
      %p144 = scmp.eq.s32.totalorder %s22, 1
      %p145 = por %p143, %p144
      %p146 = scmp.ne.s32.totalorder %s137, %s138
      %p147 = scmp.eq.s32.totalorder %s22, 0
      %p148 = por %p146, %p147
      %p149 = scmp.ne.s32.totalorder %s137, %s138
      %p150 = scmp.eq.s32.totalorder %s23, 1
      %p151 = por %p149, %p150
      %p153 = scmp.ne.s32.totalorder %s138, %s152
      %p154 = scmp.eq.s32.totalorder %s23, 0
      %p155 = por %p153, %p154
      %s156 = ssub.s32 %s17, %s24
      %p157 = scmp.eq.s32.totalorder %s156, 0
      %s159 = sadd.s32 %s158, 1
      %s160 = scalar_select %p157, %s158, %s159
      %p163 = pneg %p157
      %p164 = scmp.eq.s32.totalorder %s17, 1
      %p165 = por %p163, %p164
      %p166 = scmp.ne.s32.totalorder %s158, %s161
      %p167 = scmp.eq.s32.totalorder %s17, 0
      %p168 = por %p166, %p167
      %p169 = scmp.ne.s32.totalorder %s158, %s161
      %p170 = scmp.eq.s32.totalorder %s22, 1
      %p171 = por %p169, %p170
      %p172 = scmp.ne.s32.totalorder %s161, %s162
      %p173 = scmp.eq.s32.totalorder %s22, 0
      %p174 = por %p172, %p173
      %p175 = scmp.ne.s32.totalorder %s161, %s162
      %p176 = scmp.eq.s32.totalorder %s23, 1
      %p177 = por %p175, %p176
      %p179 = scmp.ne.s32.totalorder %s162, %s178
      %p180 = scmp.eq.s32.totalorder %s23, 0
      %p181 = por %p179, %p180
      %p182 = scmp.le.s32.totalorder 1, %s17
      %p183 = scmp.lt.s32.totalorder %s17, 3
      %p184 = pnand %p182, %p183
      %p185 = pneg %p184
      // Predicated region
      $region9: #{actor_forward.1} parent=5 // pred_check
        _
      $region10: #{actor_forward.1} parent=5 // pred_check_branch
        %187 = sbr.rel (%p184) target = $region12
      $region11: #{actor_forward.1} parent=5 // pred_region
        %s188 = ssub.s32 %s17, 1
        // Predicated region
        $region13: #{actor_forward.1} parent=11 // pred_check
          %p189 = pneg %p64
        $region14: #{actor_forward.1} parent=11 // pred_check_branch
          %191 = sbr.rel (%p189) target = $region16
        $region15: #{actor_forward.1} parent=11 // pred_region
          _
        $region16: #{actor_forward.1} parent=11 // pred_fallthru
          _
        // Predicated region
        $region17: #{actor_forward.1} parent=11 // pred_check
          %p192 = pneg %p85
        $region18: #{actor_forward.1} parent=11 // pred_check_branch
          %194 = sbr.rel (%p192) target = $region20
        $region19: #{actor_forward.1} parent=11 // pred_region
          _
        $region20: #{actor_forward.1} parent=11 // pred_fallthru
          _
        // Predicated region
        $region21: #{actor_forward.1} parent=11 // pred_check
          %p195 = pneg %p106
        $region22: #{actor_forward.1} parent=11 // pred_check_branch
          %197 = sbr.rel (%p195) target = $region24
        $region23: #{actor_forward.1} parent=11 // pred_region
          _
        $region24: #{actor_forward.1} parent=11 // pred_fallthru
          _
        // Predicated region
        $region25: #{actor_forward.1} parent=11 // pred_check
          %p198 = pneg %p127
        $region26: #{actor_forward.1} parent=11 // pred_check_branch
          %200 = sbr.rel (%p198) target = $region28
        $region27: #{actor_forward.1} parent=11 // pred_region
          _
        $region28: #{actor_forward.1} parent=11 // pred_fallthru
          _
        // Predicated region
        $region29: #{actor_forward.1} parent=11 // pred_check
          %p201 = pneg %p148
        $region30: #{actor_forward.1} parent=11 // pred_check_branch
          %203 = sbr.rel (%p201) target = $region32
        $region31: #{actor_forward.1} parent=11 // pred_region
          _
        $region32: #{actor_forward.1} parent=11 // pred_fallthru
          _
      $region12: #{actor_forward.1} parent=5 // pred_fallthru
        _
      %p204 = scmp.lt.s32.totalorder %s17, 2
      // Predicated region
      $region33: #{actor_forward.1} parent=5 // pred_check
        %p205 = pneg %p204
      $region34: #{actor_forward.1} parent=5 // pred_check_branch
        %207 = sbr.rel (%p205) target = $region36
      $region35: #{actor_forward.1} parent=5 // pred_region
        // Predicated region
        $region37: #{actor_forward.1} parent=35 // pred_check
          %p208 = pneg %p37
        $region38: #{actor_forward.1} parent=35 // pred_check_branch
          %210 = sbr.rel (%p208) target = $region40
        $region39: #{actor_forward.1} parent=35 // pred_region
          %p211 = scmp.lt.s32.totalorder %s17, 1
          %s212 = scalar_select %p211, %s17, 1
          %s213 = smul.addr %s212, 4
          %s214 = scalar_lea.vmem %s0, %s213
        $region40: #{actor_forward.1} parent=35 // pred_fallthru
          _
      $region36: #{actor_forward.1} parent=5 // pred_fallthru
        _
      %p215 = scmp.le.s32.totalorder 1, %s17
      %p216 = scmp.lt.s32.totalorder %s17, 3
      %p217 = pnand %p215, %p216
      %p218 = pneg %p217
      // Predicated region
      $region41: #{actor_forward.1} parent=5 // pred_check
        _
      $region42: #{actor_forward.1} parent=5 // pred_check_branch
        %220 = sbr.rel (%p217) target = $region44
      $region43: #{actor_forward.1} parent=5 // pred_region
        %s221 = ssub.s32 %s17, 1
        %p222 = scmp.lt.s32.totalorder %s22, 1
        %s223 = scalar_select %p222, %s22, 1
        %s224 = smul.addr %s223, 4
        %s225 = scalar_lea.vmem %s0, %s224
        %p226 = pneg %p43
        %p227 = pneg %p40
        %p228 = pneg %p64
        %p229 = pneg %p61
        %p230 = pneg %p85
        %p231 = pneg %p82
        %p232 = pneg %p106
        %p233 = pneg %p103
        %p234 = pneg %p127
        %p235 = pneg %p124
        %p236 = pneg %p148
        %p237 = pneg %p145
        %p238 = pneg %p174
        %p239 = pneg %p171
        %s240 = sand.u32 %s161, 1
        %s241 = scalar_lea.sflag [#allocation5], %s240
        %s242 = sand.u32 %s161, 1
        %s243 = scalar_lea.vmem [#allocation4], %s242
        %p244 = scmp.lt.s32.totalorder %s22, 1
        %s245 = scalar_select %p244, %s22, 1
        %s246 = smul.addr %s245, 4
        %s247 = scalar_lea.vmem %s0, %s246
        %v248 = vld [vmem:[%s1] sm:$0xff]
        %v249 = vld [vmem:[%s1 + $0x8] sm:$0xff]
        %v250 = vld [vmem:[%s1 + $0x10] sm:$0xff]
        %v251 = vld [vmem:[%s1 + $0x18] sm:$0xff]
        %v252 = vld [vmem:[%s247] sm:$0x7]
        %v253 = vld [vmem:[%s2] sm:$0xff]
        %v254 = vld [vmem:[%s2 + $0x8] sm:$0xff]
        %v255 = vld [vmem:[%s2 + $0x10] sm:$0xff]
        %v256 = vld [vmem:[%s2 + $0x18] sm:$0xff]
        %258 = vset.pattern.permute.xlu0 0
        %259 = vperm.xlu0 %258, %v253
        %v260 = vpop.permute.xlu0 %259
        %263 = vset.pattern.permute.xlu0 0
        %264 = vperm.xlu0 %263, %v254
        %v265 = vpop.permute.xlu0 %264
        %268 = vset.pattern.permute.xlu0 0
        %269 = vperm.xlu0 %268, %v255
        %v270 = vpop.permute.xlu0 %269
        %273 = vset.pattern.permute.xlu0 0
        %274 = vperm.xlu0 %273, %v256
        %v275 = vpop.permute.xlu0 %274
        %vm277 = vcmask 23552
        %v279 = vsel %vm277, %v248, 0
        %v282 = vsel %vm277, %v249, 0
        %v285 = vsel %vm277, %v250, 0
        %v288 = vsel %vm277, %v251, 0
        %vm290 = vcmask 1042432
        %v292 = vsel %vm290, %v252, 0
        %294 = vmatpush.msra.mxu0 0.0
        %295 = vmatpush.msra.mxu0 0.0
        %296 = vmatpush.msra.mxu0 0.0
        %297 = vmatpush.msra.mxu0 0.0
        %298 = vmatpush.msra.mxu0 0.0
        %299 = vmatpush.msra.mxu0 0.0
        %300 = vmatpush.msra.mxu0 0.0
        %301 = vmatpush.msra.mxu0 0.0
        %302 = vmatpush.msra.mxu0 0.0
        %303 = vmatpush.msra.mxu0 0.0
        %304 = vmatpush.msra.mxu0 0.0
        %305 = vmatpush.msra.mxu0 0.0
        %306 = vmatpush.msra.mxu0 0.0
        %307 = vmatpush.msra.mxu0 0.0
        %308 = vmatpush.msra.mxu0 0.0
        %309 = vmatpush.msra.mxu0 %v292
        %310 = vmatmul.f32.gmra.mxu0 %v279
        %v311 = vpop.f32.mrf.mxu0
        %v312 = vadd.f32 %v260, %v311
        %313 = vmatmul.f32.gmra.mxu0 %v282
        %v314 = vpop.f32.mrf.mxu0
        %v315 = vadd.f32 %v265, %v314
        %316 = vmatmul.f32.gmra.mxu0 %v285
        %v317 = vpop.f32.mrf.mxu0
        %v318 = vadd.f32 %v270, %v317
        %319 = vmatmul.f32.gmra.mxu0 %v288
        %v320 = vpop.f32.mrf.mxu0
        %v321 = vadd.f32 %v275, %v320
        %322 = vdwg.mxu0
        %v323 = vmax.f32 %v312, 0.0
        %v324 = vmax.f32 %v315, 0.0
        %v325 = vmax.f32 %v318, 0.0
        %v326 = vmax.f32 %v321, 0.0
        %v327 = vld [vmem:[%s3] sm:$0x1]
        %s328 = sld [smem:[#allocation2]]
        %v329 = vstv %s328
        %vm330 = vcmask 261120
        %v332 = vsel %vm330, %v327, 0
        %334 = vmatpush.msra.mxu0 0.0
        %335 = vmatpush.msra.mxu0 0.0
        %336 = vmatpush.msra.mxu0 0.0
        %337 = vmatpush.msra.mxu0 0.0
        %338 = vmatpush.msra.mxu0 0.0
        %339 = vmatpush.msra.mxu0 0.0
        %340 = vmatpush.msra.mxu0 0.0
        %341 = vmatpush.msra.mxu0 0.0
        %342 = vmatpush.msra.mxu0 0.0
        %343 = vmatpush.msra.mxu0 0.0
        %344 = vmatpush.msra.mxu0 0.0
        %345 = vmatpush.msra.mxu0 0.0
        %346 = vmatpush.msra.mxu0 %v326
        %347 = vmatpush.msra.mxu0 %v325
        %348 = vmatpush.msra.mxu0 %v324
        %349 = vmatpush.msra.mxu0 %v323
        %350 = vmatmul.f32.gmra.mxu0 %v332
        %v351 = vpop.f32.mrf.mxu0
        %v352 = vadd.f32 %v329, %v351
        %353 = vdwg.mxu0
        %v354 = vtanh.pop %v352
        %s355 = sld [smem:[#allocation3]]
        %v356 = vstv %s355
        %v357 = vmul.f32 %v354, %v356
        %358 = vst [vmem:[%s243] sm:$0x1] %v357
        %s359 = sand.u32 %s161, 1
        %s360 = scalar_lea.sflag [#allocation5], %s359
        %s361 = sand.u32 %s161, 1
        %s362 = scalar_lea.vmem [#allocation4], %s361
        // Predicated region
        $region45: #{actor_forward.1} parent=43 // pred_check
          %p363 = pneg %p171
        $region46: #{actor_forward.1} parent=43 // pred_check_branch
          %365 = sbr.rel (%p363) target = $region48
        $region47: #{actor_forward.1} parent=43 // pred_region
          %367 = vsyncadd %s360, 0
          %s368 = scalar_lea.hbm %s6, %s22
          %s370 = sshll.u32 %s362, 4
          %s371 = int_to_ptr.vmem [resolvable:$true] %s370
          %s372 = sshll.u32 %s368, 4
          %s373 = int_to_ptr.hbm [resolvable:$true] %s372
          %375 = dma.vmem_to_hbm [thread:$0]  %s371, 16, %s373, %s360
        $region48: #{actor_forward.1} parent=43 // pred_fallthru
          _
      $region44: #{actor_forward.1} parent=5 // pred_fallthru
        _
      %p376 = scmp.le.s32.totalorder 2, %s17
      // Predicated region
      $region49: #{actor_forward.1} parent=5 // pred_check
        %p377 = pneg %p376
      $region50: #{actor_forward.1} parent=5 // pred_check_branch
        %379 = sbr.rel (%p377) target = $region52
      $region51: #{actor_forward.1} parent=5 // pred_region
        %s380 = ssub.s32 %s17, 2
        // Predicated region
        $region53: #{actor_forward.1} parent=51 // pred_check
          %p381 = pneg %p177
        $region54: #{actor_forward.1} parent=51 // pred_check_branch
          %383 = sbr.rel (%p381) target = $region56
        $region55: #{actor_forward.1} parent=51 // pred_region
          %s384 = sand.u32 %s162, 1
          %s385 = scalar_lea.sflag [#allocation5], %s384
          %s386 = sand.u32 %s162, 1
          %s387 = scalar_lea.vmem [#allocation4], %s386
          %389 = dma.done %s385, 16
        $region56: #{actor_forward.1} parent=51 // pred_fallthru
          _
      $region52: #{actor_forward.1} parent=5 // pred_fallthru
        _
    $region6: #{actor_forward.1} parent=1 // loop_footer
      %s21 = sadd.s32 1, %s17
    $region7: #{actor_forward.1} parent=1 // loop_footer_branch
      %16 = sbr.rel target = $region3
    $region8: #{actor_forward.1} parent=1 // loop_exit
      _
    %390 = vsyncpa [#allocation5], 1
    %s391 = scalar_lea.sflag [#allocation5], 1
    %392 = vsyncpa %s391, 1

</llo_original>
